<compile_context>
chip_gen: v7x
topology: tpu7x:2x2x1
jax: 0.10.0
libtpu: 0.0.40
codegen_flags: <defaults>
</compile_context>

<pallas_src>
import functools
import math

import jax
import jax.numpy as jnp
from jax import lax
from jax.experimental import pallas as pl
from jax.experimental.pallas import tpu as pltpu


def _round_up(x, m):
    return (x + m - 1) // m * m


def _club_kernel(x_ref, wt_ref, b_ref, lab_ref,
                 pos_ref, lse_ref, colsum_ref, count_ref, *, n_valid):
    """One batch row-block: logits + per-block partial reductions."""
    i = pl.program_id(0)

    x = x_ref[...]                                   # [TB, D] (incoming dtype)
    wt = wt_ref[...]                                 # [D, L]
    logits = jnp.dot(x, wt, preferred_element_type=jnp.float32)
    logits = logits + b_ref[...].astype(jnp.float32)          # [TB, L] f32

    tb, num_labels = logits.shape

    # Valid-row mask (batch is padded up to a multiple of TB in the wrapper).
    row_ids = i * tb + lax.broadcasted_iota(jnp.int32, (tb, 1), 0)
    valid = (row_ids < n_valid).astype(jnp.float32)            # [TB, 1]

    # One-hot of labels along the label axis: used both for the "diagonal"
    # gather logits[r, labels[r]] and for the label histogram (count).
    cls = lax.broadcasted_iota(jnp.int32, (tb, num_labels), 1)
    onehot = (cls == lab_ref[...]).astype(jnp.float32)          # [TB, L]

    # Row-wise max-shifted logsumexp (matches torch log_softmax numerics).
    row_max = jnp.max(logits, axis=1, keepdims=True)
    lse = row_max + jnp.log(
        jnp.sum(jnp.exp(logits - row_max), axis=1, keepdims=True))   # [TB, 1]

    diag = jnp.sum(logits * onehot, axis=1, keepdims=True)           # [TB, 1]

    # Per-row partials (padded rows contribute exactly 0).
    pos_ref[...] = valid * (diag - lse)
    lse_ref[...] = valid * lse
    # Per-block partials, reduced in the wrapper.
    colsum_ref[...] = jnp.sum(valid * logits, axis=0, keepdims=True)[None]
    count_ref[...] = jnp.sum(valid * onehot, axis=0, keepdims=True)[None]


def club_for_categorical_forward(inputs, labels, weight, bias, *, block_rows=128):
    """CLUBForCategorical.forward (hidden_size=None) via a Pallas TPU kernel.

    inputs : [B, D] float (f32 or bf16)
    labels : [B]    int
    weight : [L, D] Linear weight (torch layout)
    bias   : [L]    Linear bias
    """
    B, D = inputs.shape
    L = weight.shape[0]

    TB = _round_up(min(block_rows, B), 8)
    B_pad = _round_up(B, TB)
    G = B_pad // TB

    if B_pad != B:
        inputs = jnp.pad(inputs, ((0, B_pad - B), (0, 0)))
        labels = jnp.pad(labels, ((0, B_pad - B),))

    # Pre-transpose once in the wrapper -> non-transposed, long-K MXU contraction.
    wt = jnp.transpose(weight).astype(inputs.dtype)          # [D, L]
    b2 = bias.reshape(1, L)
    lab2 = labels.astype(jnp.int32).reshape(B_pad, 1)

    kernel = functools.partial(_club_kernel, n_valid=B)

    elem = jnp.dtype(inputs.dtype).itemsize
    cost = pl.CostEstimate(
        flops=2 * B_pad * D * L + 8 * B_pad * L,
        transcendentals=B_pad * L + B_pad,
        bytes_accessed=(B_pad * D + D * L) * elem
        + 4 * (L + B_pad + 2 * B_pad + 2 * G * L),
    )

    pos_rows, lse_rows, colsum_p, count_p = pl.pallas_call(
        kernel,
        out_shape=(
            jax.ShapeDtypeStruct((B_pad, 1), jnp.float32),   # per-row (diag - lse)
            jax.ShapeDtypeStruct((B_pad, 1), jnp.float32),   # per-row lse
            jax.ShapeDtypeStruct((G, 1, L), jnp.float32),    # per-block column sums
            jax.ShapeDtypeStruct((G, 1, L), jnp.float32),    # per-block label counts
        ),
        grid_spec=pltpu.PrefetchScalarGridSpec(
            num_scalar_prefetch=0,
            grid=(G,),
            in_specs=[
                pl.BlockSpec((TB, D), lambda i: (i, 0)),     # inputs row block
                pl.BlockSpec((D, L), lambda i: (0, 0)),      # W^T (resident)
                pl.BlockSpec((1, L), lambda i: (0, 0)),      # bias
                pl.BlockSpec((TB, 1), lambda i: (i, 0)),     # labels row block
            ],
            out_specs=[
                pl.BlockSpec((TB, 1), lambda i: (i, 0)),
                pl.BlockSpec((TB, 1), lambda i: (i, 0)),
                pl.BlockSpec((1, 1, L), lambda i: (i, 0, 0)),
                pl.BlockSpec((1, 1, L), lambda i: (i, 0, 0)),
            ],
        ),
        compiler_params=pltpu.CompilerParams(
            dimension_semantics=("parallel",)),
        cost_estimate=cost,
    )(inputs, wt, b2, lab2)

    # Cheap O(B + G*L) final reduction (per-block partials -> scalar); keeps
    # the kernel grid axis fully parallel (megacore on v7x).
    pos_sum = jnp.sum(pos_rows)
    lse_sum = jnp.sum(lse_rows)
    colsum = jnp.sum(colsum_p[:, 0, :], axis=0)              # [L]
    count = jnp.sum(count_p[:, 0, :], axis=0)                # [L]

    positive = pos_sum / B
    negative = (jnp.dot(colsum, count) - B * lse_sum) / (B * B)
    return positive - negative


def _club_categorical_reference(inputs, labels, weight, bias):
    """Pure-JAX mirror of the torch forward (for verification)."""
    logits = inputs.astype(jnp.float32) @ weight.T.astype(jnp.float32) + bias
    logprobs = jax.nn.log_softmax(logits, axis=-1)           # [B, L]
    log_mat = logprobs[:, labels]                            # [B, B]: [i, j] = logprob[i, labels[j]]
    positive = jnp.mean(jnp.diag(log_mat))
    negative = jnp.mean(log_mat)
    return positive - negative


if __name__ == "__main__":
    key = jax.random.PRNGKey(0)
    k_x, k_lab, k_w, k_b = jax.random.split(key, 4)

    B = 50    # batch_size (not a multiple of the row block -> exercises masking)
    D = 32    # input_dim
    L = 10    # label_num

    inputs = jax.random.normal(k_x, (B, D), dtype=jnp.float32)
    labels = jax.random.randint(k_lab, (B,), 0, L, dtype=jnp.int32)

    # nn.Linear default init: U(-1/sqrt(fan_in), 1/sqrt(fan_in)).
    bound = 1.0 / math.sqrt(D)
    weight = jax.random.uniform(k_w, (L, D), jnp.float32, -bound, bound)
    bias = jax.random.uniform(k_b, (L,), jnp.float32, -bound, bound)

    out = club_for_categorical_forward(inputs, labels, weight, bias, block_rows=16)
    out = jax.block_until_ready(out)

    ref = _club_categorical_reference(inputs, labels, weight, bias)
    assert jnp.allclose(out, ref, rtol=1e-3, atol=1e-4), (out, ref)

    print("KERNEL_OK")
</pallas_src>

<mosaic_0001>
module attributes {stable_mosaic.version = 11 : i64} {
  func.func @_club_kernel(%arg0: i32, %arg1: memref<16x32xf32, #tpu.memory_space<vmem>>, %arg2: memref<32x10xf32, #tpu.memory_space<vmem>>, %arg3: memref<1x10xf32, #tpu.memory_space<vmem>>, %arg4: memref<16x1xi32, #tpu.memory_space<vmem>>, %arg5: memref<16x1xf32, #tpu.memory_space<vmem>>, %arg6: memref<16x1xf32, #tpu.memory_space<vmem>>, %arg7: memref<1x1x10xf32, #tpu.memory_space<vmem>>, %arg8: memref<1x1x10xf32, #tpu.memory_space<vmem>>) attributes {dimension_semantics = [#tpu.dimension_semantics<parallel>], iteration_bounds = array<i64: 4>, scalar_prefetch = 0 : i64, scratch_operands = 0 : i64, tpu.core_type = #tpu.core_type<tc>, window_params = [{transform_indices = @transform_0, window_bounds = array<i64: 16, 32>}, {pipeline_mode = #tpu.pipeline_mode<synchronous>, transform_indices = @transform_1, window_bounds = array<i64: 32, 10>}, {pipeline_mode = #tpu.pipeline_mode<synchronous>, transform_indices = @transform_2, window_bounds = array<i64: 1, 10>}, {transform_indices = @transform_3, window_bounds = array<i64: 16, 1>}, {transform_indices = @transform_4, window_bounds = array<i64: 16, 1>}, {transform_indices = @transform_5, window_bounds = array<i64: 16, 1>}, {transform_indices = @transform_6, window_bounds = array<i64: 1, 1, 10>}, {transform_indices = @transform_7, window_bounds = array<i64: 1, 1, 10>}]} {
    %c0 = arith.constant 0 : index
    %c0_0 = arith.constant 0 : index
    %0 = vector.load %arg1[%c0, %c0_0] : memref<16x32xf32, #tpu.memory_space<vmem>>, vector<16x32xf32>
    %c0_1 = arith.constant 0 : index
    %c0_2 = arith.constant 0 : index
    %1 = vector.load %arg2[%c0_1, %c0_2] : memref<32x10xf32, #tpu.memory_space<vmem>>, vector<32x10xf32>
    %cst = arith.constant dense<0.000000e+00> : vector<16x10xf32>
    %2 = tpu.matmul %0, %1, %cst {dimension_numbers = #tpu.dot_dimension_numbers<[1], [0], [0], [1], [0, 0, 1, 1], [], []>} : vector<16x32xf32>, vector<32x10xf32>, vector<16x10xf32> -> vector<16x10xf32>
    %c0_3 = arith.constant 0 : index
    %c0_4 = arith.constant 0 : index
    %3 = vector.load %arg3[%c0_3, %c0_4] : memref<1x10xf32, #tpu.memory_space<vmem>>, vector<1x10xf32>
    %4 = vector.broadcast %3 : vector<1x10xf32> to vector<16x10xf32>
    %5 = arith.addf %2, %4 : vector<16x10xf32>
    %c16_i32 = arith.constant 16 : i32
    %6 = arith.muli %arg0, %c16_i32 : i32
    %7 = tpu.iota {dimensions = array<i32: 0>} : vector<16x1xi32>
    %8 = vector.broadcast %6 : i32 to vector<16x1xi32>
    %9 = arith.addi %8, %7 : vector<16x1xi32>
    %c50_i32 = arith.constant 50 : i32
    %10 = vector.broadcast %c50_i32 : i32 to vector<16x1xi32>
    %11 = arith.cmpi slt, %9, %10 : vector<16x1xi32>
    %12 = arith.extui %11 : vector<16x1xi1> to vector<16x1xi32>
    %13 = arith.sitofp %12 : vector<16x1xi32> to vector<16x1xf32>
    %14 = tpu.iota {dimensions = array<i32: 1>} : vector<16x10xi32>
    %c0_5 = arith.constant 0 : index
    %c0_6 = arith.constant 0 : index
    %15 = vector.load %arg4[%c0_5, %c0_6] : memref<16x1xi32, #tpu.memory_space<vmem>>, vector<16x1xi32>
    %16 = vector.broadcast %15 : vector<16x1xi32> to vector<16x10xi32>
    %17 = arith.cmpi eq, %14, %16 : vector<16x10xi32>
    %18 = arith.extui %17 : vector<16x10xi1> to vector<16x10xi32>
    %19 = arith.sitofp %18 : vector<16x10xi32> to vector<16x10xf32>
    %cst_7 = arith.constant dense<0xFF800000> : vector<16xf32>
    %20 = vector.multi_reduction <maximumf>, %5, %cst_7 [1] : vector<16x10xf32> to vector<16xf32>
    %21 = vector.shape_cast %20 : vector<16xf32> to vector<16x1xf32>
    %22 = vector.broadcast %21 : vector<16x1xf32> to vector<16x10xf32>
    %23 = arith.subf %5, %22 : vector<16x10xf32>
    %24 = math.exp %23 : vector<16x10xf32>
    %cst_8 = arith.constant dense<0.000000e+00> : vector<16xf32>
    %25 = vector.multi_reduction <add>, %24, %cst_8 [1] : vector<16x10xf32> to vector<16xf32>
    %26 = vector.shape_cast %25 : vector<16xf32> to vector<16x1xf32>
    %27 = math.log %26 : vector<16x1xf32>
    %28 = arith.addf %21, %27 : vector<16x1xf32>
    %29 = arith.mulf %5, %19 : vector<16x10xf32>
    %cst_9 = arith.constant dense<0.000000e+00> : vector<16xf32>
    %30 = vector.multi_reduction <add>, %29, %cst_9 [1] : vector<16x10xf32> to vector<16xf32>
    %31 = vector.shape_cast %30 : vector<16xf32> to vector<16x1xf32>
    %32 = arith.subf %31, %28 : vector<16x1xf32>
    %33 = arith.mulf %13, %32 : vector<16x1xf32>
    %c0_10 = arith.constant 0 : index
    %c0_11 = arith.constant 0 : index
    %34 = vector.load %arg5[%c0_10, %c0_11] : memref<16x1xf32, #tpu.memory_space<vmem>>, vector<16x1xf32>
    tpu.vector_store %arg5[%c0_10, %c0_11], %33 {strides = array<i32>} : memref<16x1xf32, #tpu.memory_space<vmem>>, vector<16x1xf32>,
    %35 = arith.mulf %13, %28 : vector<16x1xf32>
    %c0_12 = arith.constant 0 : index
    %c0_13 = arith.constant 0 : index
    %36 = vector.load %arg6[%c0_12, %c0_13] : memref<16x1xf32, #tpu.memory_space<vmem>>, vector<16x1xf32>
    tpu.vector_store %arg6[%c0_12, %c0_13], %35 {strides = array<i32>} : memref<16x1xf32, #tpu.memory_space<vmem>>, vector<16x1xf32>,
    %37 = vector.broadcast %13 : vector<16x1xf32> to vector<16x10xf32>
    %38 = arith.mulf %37, %5 : vector<16x10xf32>
    %cst_14 = arith.constant dense<0.000000e+00> : vector<10xf32>
    %39 = vector.multi_reduction <add>, %38, %cst_14 [0] : vector<16x10xf32> to vector<10xf32>
    %40 = vector.shape_cast %39 : vector<10xf32> to vector<1x10xf32>
    %41 = vector.shape_cast %40 : vector<1x10xf32> to vector<1x1x10xf32>
    %c0_15 = arith.constant 0 : index
    %c0_16 = arith.constant 0 : index
    %c0_17 = arith.constant 0 : index
    %42 = vector.load %arg7[%c0_15, %c0_16, %c0_17] : memref<1x1x10xf32, #tpu.memory_space<vmem>>, vector<1x1x10xf32>
    tpu.vector_store %arg7[%c0_15, %c0_16, %c0_17], %41 {strides = array<i32>} : memref<1x1x10xf32, #tpu.memory_space<vmem>>, vector<1x1x10xf32>,
    %43 = vector.broadcast %13 : vector<16x1xf32> to vector<16x10xf32>
    %44 = arith.mulf %43, %19 : vector<16x10xf32>
    %cst_18 = arith.constant dense<0.000000e+00> : vector<10xf32>
    %45 = vector.multi_reduction <add>, %44, %cst_18 [0] : vector<16x10xf32> to vector<10xf32>
    %46 = vector.shape_cast %45 : vector<10xf32> to vector<1x10xf32>
    %47 = vector.shape_cast %46 : vector<1x10xf32> to vector<1x1x10xf32>
    %c0_19 = arith.constant 0 : index
    %c0_20 = arith.constant 0 : index
    %c0_21 = arith.constant 0 : index
    %48 = vector.load %arg8[%c0_19, %c0_20, %c0_21] : memref<1x1x10xf32, #tpu.memory_space<vmem>>, vector<1x1x10xf32>
    tpu.vector_store %arg8[%c0_19, %c0_20, %c0_21], %47 {strides = array<i32>} : memref<1x1x10xf32, #tpu.memory_space<vmem>>, vector<1x1x10xf32>,
    return
  }
  func.func @transform_0(%arg0: i32) -> (i32, i32) {
    %c0_i32 = arith.constant 0 : i32
    %c0_i32_0 = arith.constant 0 : i32
    return %arg0, %c0_i32 : i32, i32
  }
  func.func @transform_1(%arg0: i32) -> (i32, i32) {
    %c0_i32 = arith.constant 0 : i32
    %c0_i32_0 = arith.constant 0 : i32
    %c0_i32_1 = arith.constant 0 : i32
    return %c0_i32, %c0_i32_0 : i32, i32
  }
  func.func @transform_2(%arg0: i32) -> (i32, i32) {
    %c0_i32 = arith.constant 0 : i32
    %c0_i32_0 = arith.constant 0 : i32
    %c0_i32_1 = arith.constant 0 : i32
    return %c0_i32, %c0_i32_0 : i32, i32
  }
  func.func @transform_3(%arg0: i32) -> (i32, i32) {
    %c0_i32 = arith.constant 0 : i32
    %c0_i32_0 = arith.constant 0 : i32
    return %arg0, %c0_i32 : i32, i32
  }
  func.func @transform_4(%arg0: i32) -> (i32, i32) {
    %c0_i32 = arith.constant 0 : i32
    %c0_i32_0 = arith.constant 0 : i32
    return %arg0, %c0_i32 : i32, i32
  }
  func.func @transform_5(%arg0: i32) -> (i32, i32) {
    %c0_i32 = arith.constant 0 : i32
    %c0_i32_0 = arith.constant 0 : i32
    return %arg0, %c0_i32 : i32, i32
  }
  func.func @transform_6(%arg0: i32) -> (i32, i32, i32) {
    %c0_i32 = arith.constant 0 : i32
    %c0_i32_0 = arith.constant 0 : i32
    %c0_i32_1 = arith.constant 0 : i32
    return %arg0, %c0_i32, %c0_i32_0 : i32, i32, i32
  }
  func.func @transform_7(%arg0: i32) -> (i32, i32, i32) {
    %c0_i32 = arith.constant 0 : i32
    %c0_i32_0 = arith.constant 0 : i32
    %c0_i32_1 = arith.constant 0 : i32
    return %arg0, %c0_i32, %c0_i32_0 : i32, i32, i32
  }
}

</mosaic_0001>

<llo_original>
// kernel: tpu_custom_call.1
$region0: #{tpu_custom_call.1}
  #allocation0 [shape = 'u32[]', space=smem, size = 0x4, offset = 0x4, fixed_abs, tag = 'smem constant byte address 0x4 - core index']
  #allocation1 [shape = 'u32[144,128]{1,0:T(1,128)}', space=vmem, size = 0x12000, scoped, tag = 'internal scratch']
  %s0 = inlined_call_operand.vmem [shape: f32[64,32], index: 0, kind: input, shape index: {}]
  %s1 = inlined_call_operand.vmem [shape: f32[32,10], index: 1, kind: input, shape index: {}]
  %s2 = inlined_call_operand.vmem [shape: f32[1,10], index: 2, kind: input, shape index: {}]
  %s3 = inlined_call_operand.vmem [shape: s32[64,1], index: 3, kind: input, shape index: {}]
  %s4 = inlined_call_operand.vmem [shape: f32[64,1], index: 4, kind: output, shape index: {0}]
  %s5 = inlined_call_operand.vmem [shape: f32[64,1], index: 5, kind: output, shape index: {1}]
  %s6 = inlined_call_operand.hbm [shape: f32[4,1,10], index: 6, kind: output, shape index: {2}]
  %s7 = inlined_call_operand.hbm [shape: f32[4,1,10], index: 7, kind: output, shape index: {3}]
  %8 = xla_tuple %s4, %s5, %s6, %s7
  %s9 = sld [smem:[#allocation0]]
  $region73: #{tpu_custom_call.1} parent=0
    _
  %s11 = ssub.s32 1, %s9
  %s12 = scalar_select 0, %s11, %s9
  $region1: #{tpu_custom_call.1} parent=0
    #allocation2 [shape = 'u8[1024]{0}', space=vmem, size = 0x400, scoped, tag = 'output window, operand 2']
    #allocation3 [shape = 's32[2]{0}', space=sflag, size = 0x8, scoped, tag = 'scoped memory for tpu_custom_call.1']
    #allocation4 [shape = 'u8[1024]{0}', space=vmem, size = 0x400, scoped, tag = 'output window, operand 3']
    #allocation5 [shape = 's32[2]{0}', space=sflag, size = 0x8, scoped, tag = 'scoped memory for tpu_custom_call.1']
    %13 = vsyncpa [#allocation3], 0
    %s14 = scalar_lea.sflag [#allocation3], 1
    %15 = vsyncpa %s14, 0
    %16 = vsyncpa [#allocation5], 0
    %s17 = scalar_lea.sflag [#allocation5], 1
    %18 = vsyncpa %s17, 0
    loop: start=0, step=1, limit=6
    $region2: #{tpu_custom_call.1} parent=1 // loop_pre_header
      _
    $region3: #{tpu_custom_call.1} parent=1 // loop_header
      %s20 = sphi 0, %s24
      %p21 = scmp.ge.s32.totalorder %s20, 6
      %s30 = sphi 0, %s32
      %s33 = sphi 0, %s30
      %s34 = sphi 0, %s33
      %s50 = sphi 0, %s34
      %s54 = sphi 0, %s54
      %s56 = sphi 0, %s54
      %s57 = sphi 0, %s56
      %s71 = sphi 0, %s57
      %s75 = sphi 0, %s75
      %s77 = sphi 0, %s75
      %s78 = sphi 0, %s77
      %s92 = sphi 0, %s78
      %s98 = sphi 0, %s100
      %s101 = sphi 0, %s98
      %s102 = sphi 0, %s101
      %s118 = sphi 0, %s102
      %s124 = sphi 0, %s126
      %s127 = sphi 0, %s124
      %s128 = sphi 0, %s127
      %s144 = sphi 0, %s128
      %s150 = sphi 0, %s152
      %s153 = sphi 0, %s150
      %s154 = sphi 0, %s153
      %s170 = sphi 0, %s154
      %s176 = sphi 0, %s178
      %s179 = sphi 0, %s176
      %s180 = sphi 0, %s179
      %s196 = sphi 0, %s180
      %s202 = sphi 0, %s204
      %s205 = sphi 0, %s202
      %s206 = sphi 0, %s205
      %s222 = sphi 0, %s206
    $region4: #{tpu_custom_call.1} parent=1 // loop_header_branch
      %23 = sbr.rel (%p21) target = $region8
    $region5: #{tpu_custom_call.1} parent=1 // loop_body
      %s25 = ssub.s32 %s20, 1
      %s26 = ssub.s32 %s20, 2
      %s27 = sadd.s32 %s20, 1
      %s28 = ssub.s32 %s20, %s27
      %p29 = scmp.eq.s32.totalorder %s28, 0
      %s31 = sadd.s32 %s30, 1
      %s32 = scalar_select %p29, %s30, %s31
      %p35 = pneg %p29
      %p36 = scmp.eq.s32.totalorder %s20, 3
      %p37 = por %p35, %p36
      %p38 = scmp.ne.s32.totalorder %s30, %s33
      %p39 = scmp.eq.s32.totalorder %s20, 0
      %p40 = por %p38, %p39
      %p41 = scmp.ne.s32.totalorder %s30, %s33
      %p42 = scmp.eq.s32.totalorder %s25, 3
      %p43 = por %p41, %p42
      %p44 = scmp.ne.s32.totalorder %s33, %s34
      %p45 = scmp.eq.s32.totalorder %s25, 0
      %p46 = por %p44, %p45
      %p47 = scmp.ne.s32.totalorder %s33, %s34
      %p48 = scmp.eq.s32.totalorder %s26, 3
      %p49 = por %p47, %p48
      %p51 = scmp.ne.s32.totalorder %s34, %s50
      %p52 = scmp.eq.s32.totalorder %s26, 0
      %p53 = por %p51, %p52
      %s55 = sadd.s32 %s54, 1
      %p58 = scmp.eq.s32.totalorder %s20, 3
      %p59 = scmp.ne.s32.totalorder %s54, %s56
      %p60 = scmp.eq.s32.totalorder %s20, 0
      %p61 = por %p59, %p60
      %p62 = scmp.ne.s32.totalorder %s54, %s56
      %p63 = scmp.eq.s32.totalorder %s25, 3
      %p64 = por %p62, %p63
      %p65 = scmp.ne.s32.totalorder %s56, %s57
      %p66 = scmp.eq.s32.totalorder %s25, 0
      %p67 = por %p65, %p66
      %p68 = scmp.ne.s32.totalorder %s56, %s57
      %p69 = scmp.eq.s32.totalorder %s26, 3
      %p70 = por %p68, %p69
      %p72 = scmp.ne.s32.totalorder %s57, %s71
      %p73 = scmp.eq.s32.totalorder %s26, 0
      %p74 = por %p72, %p73
      %s76 = sadd.s32 %s75, 1
      %p79 = scmp.eq.s32.totalorder %s20, 3
      %p80 = scmp.ne.s32.totalorder %s75, %s77
      %p81 = scmp.eq.s32.totalorder %s20, 0
      %p82 = por %p80, %p81
      %p83 = scmp.ne.s32.totalorder %s75, %s77
      %p84 = scmp.eq.s32.totalorder %s25, 3
      %p85 = por %p83, %p84
      %p86 = scmp.ne.s32.totalorder %s77, %s78
      %p87 = scmp.eq.s32.totalorder %s25, 0
      %p88 = por %p86, %p87
      %p89 = scmp.ne.s32.totalorder %s77, %s78
      %p90 = scmp.eq.s32.totalorder %s26, 3
      %p91 = por %p89, %p90
      %p93 = scmp.ne.s32.totalorder %s78, %s92
      %p94 = scmp.eq.s32.totalorder %s26, 0
      %p95 = por %p93, %p94
      %s96 = ssub.s32 %s20, %s27
      %p97 = scmp.eq.s32.totalorder %s96, 0
      %s99 = sadd.s32 %s98, 1
      %s100 = scalar_select %p97, %s98, %s99
      %p103 = pneg %p97
      %p104 = scmp.eq.s32.totalorder %s20, 3
      %p105 = por %p103, %p104
      %p106 = scmp.ne.s32.totalorder %s98, %s101
      %p107 = scmp.eq.s32.totalorder %s20, 0
      %p108 = por %p106, %p107
      %p109 = scmp.ne.s32.totalorder %s98, %s101
      %p110 = scmp.eq.s32.totalorder %s25, 3
      %p111 = por %p109, %p110
      %p112 = scmp.ne.s32.totalorder %s101, %s102
      %p113 = scmp.eq.s32.totalorder %s25, 0
      %p114 = por %p112, %p113
      %p115 = scmp.ne.s32.totalorder %s101, %s102
      %p116 = scmp.eq.s32.totalorder %s26, 3
      %p117 = por %p115, %p116
      %p119 = scmp.ne.s32.totalorder %s102, %s118
      %p120 = scmp.eq.s32.totalorder %s26, 0
      %p121 = por %p119, %p120
      %s122 = ssub.s32 %s20, %s27
      %p123 = scmp.eq.s32.totalorder %s122, 0
      %s125 = sadd.s32 %s124, 1
      %s126 = scalar_select %p123, %s124, %s125
      %p129 = pneg %p123
      %p130 = scmp.eq.s32.totalorder %s20, 3
      %p131 = por %p129, %p130
      %p132 = scmp.ne.s32.totalorder %s124, %s127
      %p133 = scmp.eq.s32.totalorder %s20, 0
      %p134 = por %p132, %p133
      %p135 = scmp.ne.s32.totalorder %s124, %s127
      %p136 = scmp.eq.s32.totalorder %s25, 3
      %p137 = por %p135, %p136
      %p138 = scmp.ne.s32.totalorder %s127, %s128
      %p139 = scmp.eq.s32.totalorder %s25, 0
      %p140 = por %p138, %p139
      %p141 = scmp.ne.s32.totalorder %s127, %s128
      %p142 = scmp.eq.s32.totalorder %s26, 3
      %p143 = por %p141, %p142
      %p145 = scmp.ne.s32.totalorder %s128, %s144
      %p146 = scmp.eq.s32.totalorder %s26, 0
      %p147 = por %p145, %p146
      %s148 = ssub.s32 %s20, %s27
      %p149 = scmp.eq.s32.totalorder %s148, 0
      %s151 = sadd.s32 %s150, 1
      %s152 = scalar_select %p149, %s150, %s151
      %p155 = pneg %p149
      %p156 = scmp.eq.s32.totalorder %s20, 3
      %p157 = por %p155, %p156
      %p158 = scmp.ne.s32.totalorder %s150, %s153
      %p159 = scmp.eq.s32.totalorder %s20, 0
      %p160 = por %p158, %p159
      %p161 = scmp.ne.s32.totalorder %s150, %s153
      %p162 = scmp.eq.s32.totalorder %s25, 3
      %p163 = por %p161, %p162
      %p164 = scmp.ne.s32.totalorder %s153, %s154
      %p165 = scmp.eq.s32.totalorder %s25, 0
      %p166 = por %p164, %p165
      %p167 = scmp.ne.s32.totalorder %s153, %s154
      %p168 = scmp.eq.s32.totalorder %s26, 3
      %p169 = por %p167, %p168
      %p171 = scmp.ne.s32.totalorder %s154, %s170
      %p172 = scmp.eq.s32.totalorder %s26, 0
      %p173 = por %p171, %p172
      %s174 = ssub.s32 %s20, %s27
      %p175 = scmp.eq.s32.totalorder %s174, 0
      %s177 = sadd.s32 %s176, 1
      %s178 = scalar_select %p175, %s176, %s177
      %p181 = pneg %p175
      %p182 = scmp.eq.s32.totalorder %s20, 3
      %p183 = por %p181, %p182
      %p184 = scmp.ne.s32.totalorder %s176, %s179
      %p185 = scmp.eq.s32.totalorder %s20, 0
      %p186 = por %p184, %p185
      %p187 = scmp.ne.s32.totalorder %s176, %s179
      %p188 = scmp.eq.s32.totalorder %s25, 3
      %p189 = por %p187, %p188
      %p190 = scmp.ne.s32.totalorder %s179, %s180
      %p191 = scmp.eq.s32.totalorder %s25, 0
      %p192 = por %p190, %p191
      %p193 = scmp.ne.s32.totalorder %s179, %s180
      %p194 = scmp.eq.s32.totalorder %s26, 3
      %p195 = por %p193, %p194
      %p197 = scmp.ne.s32.totalorder %s180, %s196
      %p198 = scmp.eq.s32.totalorder %s26, 0
      %p199 = por %p197, %p198
      %s200 = ssub.s32 %s20, %s27
      %p201 = scmp.eq.s32.totalorder %s200, 0
      %s203 = sadd.s32 %s202, 1
      %s204 = scalar_select %p201, %s202, %s203
      %p207 = pneg %p201
      %p208 = scmp.eq.s32.totalorder %s20, 3
      %p209 = por %p207, %p208
      %p210 = scmp.ne.s32.totalorder %s202, %s205
      %p211 = scmp.eq.s32.totalorder %s20, 0
      %p212 = por %p210, %p211
      %p213 = scmp.ne.s32.totalorder %s202, %s205
      %p214 = scmp.eq.s32.totalorder %s25, 3
      %p215 = por %p213, %p214
      %p216 = scmp.ne.s32.totalorder %s205, %s206
      %p217 = scmp.eq.s32.totalorder %s25, 0
      %p218 = por %p216, %p217
      %p219 = scmp.ne.s32.totalorder %s205, %s206
      %p220 = scmp.eq.s32.totalorder %s26, 3
      %p221 = por %p219, %p220
      %p223 = scmp.ne.s32.totalorder %s206, %s222
      %p224 = scmp.eq.s32.totalorder %s26, 0
      %p225 = por %p223, %p224
      %p226 = scmp.le.s32.totalorder 1, %s20
      %p227 = scmp.lt.s32.totalorder %s20, 5
      %p228 = pnand %p226, %p227
      %p229 = pneg %p228
      // Predicated region
      $region9: #{tpu_custom_call.1} parent=5 // pred_check
        _
      $region10: #{tpu_custom_call.1} parent=5 // pred_check_branch
        %231 = sbr.rel (%p228) target = $region12
      $region11: #{tpu_custom_call.1} parent=5 // pred_region
        %s232 = ssub.s32 %s20, 1
        // Predicated region
        $region13: #{tpu_custom_call.1} parent=11 // pred_check
          %p233 = pneg %p67
        $region14: #{tpu_custom_call.1} parent=11 // pred_check_branch
          %235 = sbr.rel (%p233) target = $region16
        $region15: #{tpu_custom_call.1} parent=11 // pred_region
          _
        $region16: #{tpu_custom_call.1} parent=11 // pred_fallthru
          _
        // Predicated region
        $region17: #{tpu_custom_call.1} parent=11 // pred_check
          %p236 = pneg %p88
        $region18: #{tpu_custom_call.1} parent=11 // pred_check_branch
          %238 = sbr.rel (%p236) target = $region20
        $region19: #{tpu_custom_call.1} parent=11 // pred_region
          _
        $region20: #{tpu_custom_call.1} parent=11 // pred_fallthru
          _
      $region12: #{tpu_custom_call.1} parent=5 // pred_fallthru
        _
      %p239 = scmp.lt.s32.totalorder %s20, 4
      // Predicated region
      $region21: #{tpu_custom_call.1} parent=5 // pred_check
        %p240 = pneg %p239
      $region22: #{tpu_custom_call.1} parent=5 // pred_check_branch
        %242 = sbr.rel (%p240) target = $region24
      $region23: #{tpu_custom_call.1} parent=5 // pred_region
        // Predicated region
        $region25: #{tpu_custom_call.1} parent=23 // pred_check
          %p243 = pneg %p40
        $region26: #{tpu_custom_call.1} parent=23 // pred_check_branch
          %245 = sbr.rel (%p243) target = $region28
        $region27: #{tpu_custom_call.1} parent=23 // pred_region
          %s246 = smul.u32 2, %s20
          %p247 = scmp.lt.s32.totalorder %s246, 7
          %s248 = scalar_select %p247, %s246, 7
          %s249 = smul.addr %s248, 8
          %s250 = scalar_lea.vmem %s0, %s249
          %s251 = smul.u32 2, %s20
        $region28: #{tpu_custom_call.1} parent=23 // pred_fallthru
          _
        // Predicated region
        $region29: #{tpu_custom_call.1} parent=23 // pred_check
          %p252 = pneg %p108
        $region30: #{tpu_custom_call.1} parent=23 // pred_check_branch
          %254 = sbr.rel (%p252) target = $region32
        $region31: #{tpu_custom_call.1} parent=23 // pred_region
          %s255 = smul.u32 2, %s20
          %p256 = scmp.lt.s32.totalorder %s255, 7
          %s257 = scalar_select %p256, %s255, 7
          %s258 = smul.addr %s257, 8
          %s259 = scalar_lea.vmem %s3, %s258
          %s260 = smul.u32 2, %s20
        $region32: #{tpu_custom_call.1} parent=23 // pred_fallthru
          _
      $region24: #{tpu_custom_call.1} parent=5 // pred_fallthru
        _
      %p261 = scmp.le.s32.totalorder 1, %s20
      %p262 = scmp.lt.s32.totalorder %s20, 5
      %p263 = pnand %p261, %p262
      %p264 = pneg %p263
      // Predicated region
      $region33: #{tpu_custom_call.1} parent=5 // pred_check
        _
      $region34: #{tpu_custom_call.1} parent=5 // pred_check_branch
        %266 = sbr.rel (%p263) target = $region36
      $region35: #{tpu_custom_call.1} parent=5 // pred_region
        %s267 = ssub.s32 %s20, 1
        %s268 = smul.u32 2, %s25
        %p269 = scmp.lt.s32.totalorder %s268, 7
        %s270 = scalar_select %p269, %s268, 7
        %s271 = smul.addr %s270, 8
        %s272 = scalar_lea.vmem %s0, %s271
        %p273 = pneg %p46
        %p274 = pneg %p43
        %p275 = pneg %p67
        %p276 = pneg %p64
        %p277 = pneg %p88
        %p278 = pneg %p85
        %s279 = smul.u32 2, %s25
        %p280 = scmp.lt.s32.totalorder %s279, 7
        %s281 = scalar_select %p280, %s279, 7
        %s282 = smul.addr %s281, 8
        %s283 = scalar_lea.vmem %s3, %s282
        %p284 = pneg %p114
        %p285 = pneg %p111
        %p286 = pneg %p140
        %p287 = pneg %p137
        %s288 = smul.u32 2, %s25
        %p289 = scmp.lt.s32.totalorder %s288, 7
        %s290 = scalar_select %p289, %s288, 7
        %s291 = smul.addr %s290, 8
        %s292 = scalar_lea.vmem %s4, %s291
        %p293 = pneg %p166
        %p294 = pneg %p163
        %s295 = smul.u32 2, %s25
        %p296 = scmp.lt.s32.totalorder %s295, 7
        %s297 = scalar_select %p296, %s295, 7
        %s298 = smul.addr %s297, 8
        %s299 = scalar_lea.vmem %s5, %s298
        %p300 = pneg %p192
        %p301 = pneg %p189
        %s302 = sand.u32 %s179, 1
        %s303 = scalar_lea.sflag [#allocation3], %s302
        %s304 = sand.u32 %s179, 1
        %s305 = scalar_lea.vmem [#allocation2], %s304
        %p306 = pneg %p218
        %p307 = pneg %p215
        %s308 = sand.u32 %s205, 1
        %s309 = scalar_lea.sflag [#allocation5], %s308
        %s310 = sand.u32 %s205, 1
        %s311 = scalar_lea.vmem [#allocation4], %s310
        %s312 = smul.u32 2, %s25
        %p313 = scmp.lt.s32.totalorder %s312, 7
        %s314 = scalar_select %p313, %s312, 7
        %s315 = smul.addr %s314, 8
        %s316 = scalar_lea.vmem %s0, %s315
        %s317 = smul.u32 2, %s25
        %s318 = smul.u32 2, %s25
        %p319 = scmp.lt.s32.totalorder %s318, 7
        %s320 = scalar_select %p319, %s318, 7
        %s321 = smul.addr %s320, 8
        %s322 = scalar_lea.vmem %s3, %s321
        %s323 = smul.u32 2, %s25
        %s324 = smul.u32 2, %s25
        %p325 = scmp.lt.s32.totalorder %s324, 7
        %s326 = scalar_select %p325, %s324, 7
        %s327 = smul.addr %s326, 8
        %s328 = scalar_lea.vmem %s4, %s327
        %s329 = smul.u32 2, %s25
        %s330 = smul.u32 2, %s25
        %p331 = scmp.lt.s32.totalorder %s330, 7
        %s332 = scalar_select %p331, %s330, 7
        %s333 = smul.addr %s332, 8
        %s334 = scalar_lea.vmem %s5, %s333
        %s335 = smul.u32 2, %s25
        %v336 = vld [vmem:[%s316] sm:$0xff]
        %v337 = vld [vmem:[%s316 + $0x8] sm:$0xff]
        %v338 = vld [vmem:[%s1] sm:$0xff]
        %v339 = vld [vmem:[%s1 + $0x8] sm:$0xff]
        %v340 = vld [vmem:[%s1 + $0x10] sm:$0xff]
        %v341 = vld [vmem:[%s1 + $0x18] sm:$0xff]
        %v342 = vld [vmem:[%s2] sm:$0x1]
        %v344 = vlaneseq
        %v345 = vshrl.u32 %v344, 7
        %v346 = vsub.s32 0, %v345
        %v347 = vrot.slane %v342, %v346
        %vm349 = vcmask 261120
        %v351 = vsel %vm349, %v336, 0
        %v354 = vsel %vm349, %v337, 0
        %356 = vmatprep.subr.mxu0 0.0
        %357 = vmatpush1.msra.mxu0 %v338
        %358 = vmatprep.subr.mxu0 0.0
        %359 = vmatpush1.msra.mxu0 %v339
        %360 = vmatprep.subr.mxu0 0.0
        %361 = vmatpush1.msra.mxu0 %v340
        %362 = vmatprep.subr.mxu0 0.0
        %363 = vmatpush1.msra.mxu0 %v341
        %364 = vmatprep.subr.mxu0 0.0
        %365 = vmatpush1.msra.mxu0 0.0
        %366 = vmatprep.subr.mxu0 0.0
        %367 = vmatpush1.msra.mxu0 0.0
        %368 = vmatprep.subr.mxu0 0.0
        %369 = vmatpush1.msra.mxu0 0.0
        %370 = vmatprep.subr.mxu0 0.0
        %371 = vmatpush1.msra.mxu0 0.0
        %372 = vmatprep.subr.mxu0 0.0
        %373 = vmatpush1.msra.mxu0 0.0
        %374 = vmatprep.subr.mxu0 0.0
        %375 = vmatpush1.msra.mxu0 0.0
        %376 = vmatprep.subr.mxu0 0.0
        %377 = vmatpush1.msra.mxu0 0.0
        %378 = vmatprep.subr.mxu0 0.0
        %379 = vmatpush1.msra.mxu0 0.0
        %380 = vmatprep.subr.mxu0 0.0
        %381 = vmatpush1.msra.mxu0 0.0
        %382 = vmatprep.subr.mxu0 0.0
        %383 = vmatpush1.msra.mxu0 0.0
        %384 = vmatprep.subr.mxu0 0.0
        %385 = vmatpush1.msra.mxu0 0.0
        %386 = vmatprep.subr.mxu0 0.0
        %387 = vmatpush1.msra.mxu0 0.0
        %388 = vmatprep.subr.mxu0 0.0
        %389 = vmatpush1.msra.mxu0 0.0
        %390 = vmatprep.subr.mxu0 0.0
        %391 = vmatpush1.msra.mxu0 0.0
        %392 = vmatprep.subr.mxu0 0.0
        %393 = vmatpush1.msra.mxu0 0.0
        %394 = vmatprep.subr.mxu0 0.0
        %395 = vmatpush1.msra.mxu0 0.0
        %396 = vmatprep.subr.mxu0 0.0
        %397 = vmatpush1.msra.mxu0 0.0
        %398 = vmatprep.subr.mxu0 0.0
        %399 = vmatpush1.msra.mxu0 0.0
        %400 = vmatprep.subr.mxu0 0.0
        %401 = vmatpush1.msra.mxu0 0.0
        %402 = vmatprep.subr.mxu0 0.0
        %403 = vmatpush1.msra.mxu0 0.0
        %404 = vmatprep.subr.mxu0 0.0
        %405 = vmatpush1.msra.mxu0 0.0
        %406 = vmatprep.subr.mxu0 0.0
        %407 = vmatpush1.msra.mxu0 0.0
        %408 = vmatprep.subr.mxu0 0.0
        %409 = vmatpush1.msra.mxu0 0.0
        %410 = vmatprep.subr.mxu0 0.0
        %411 = vmatpush1.msra.mxu0 0.0
        %412 = vmatprep.subr.mxu0 0.0
        %413 = vmatpush1.msra.mxu0 0.0
        %414 = vmatprep.subr.mxu0 0.0
        %415 = vmatpush1.msra.mxu0 0.0
        %416 = vmatprep.subr.mxu0 0.0
        %417 = vmatpush1.msra.mxu0 0.0
        %418 = vmatprep.subr.mxu0 0.0
        %419 = vmatpush1.msra.mxu0 0.0
        %420 = vmatprep.mubr.f32.mxu0 0.0
        %421 = vmatmul.mubr.f32.gmra.mrb[0].mxu0 %v351
        %v422 = vpop.f32.mrb[0].mxu0
        %v423 = vadd.f32 %v347, %v422
        %v424 = vpop.f32.mrb[0].mxu0
        %425 = vmatprep.mubr.f32.mxu0 0.0
        %426 = vmatmul.mubr.f32.gmra.mrb[0].mxu0 %v354
        %v427 = vpop.f32.mrb[0].mxu0
        %v428 = vadd.f32 %v347, %v427
        %v429 = vpop.f32.mrb[0].mxu0
        %430 = vdwg.mxu0
        %s431 = smul.u32 %s25, 16
        %v432 = vlaneseq
        %v433 = vshrl.u32 %v432, 7
        %v434 = vadd.s32 %v433, 8
        %v435 = vstv %s431
        %v436 = vadd.s32 %v435, %v433
        %v437 = vadd.s32 %v435, %v434
        %vm438 = vcmp.lt.s32.totalorder %v436, 50
        %vm439 = vcmp.lt.s32.totalorder %v437, 50
        %v440 = vsel %vm438, 1, 0
        %v441 = vsel %vm439, 1, 0
        %v442 = vcvt.s32.f32 %v440
        %v443 = vcvt.s32.f32 %v441
        %v444 = vlaneseq
        %v445 = vand.u32 %v444, 127
        %v446 = vld [vmem:[%s322] sm:$0xff]
        %v447 = vld [vmem:[%s322 + $0x8] sm:$0xff]
        %448 = vset.pattern.permute.xlu0 0
        %449 = vperm.xlu0 %448, %v446
        %v450 = vpop.permute.xlu0 %449
        %451 = vset.pattern.permute.xlu0 0
        %452 = vperm.xlu0 %451, %v447
        %v453 = vpop.permute.xlu0 %452
        %vm454 = vcmp.eq.s32.totalorder %v445, %v450
        %vm455 = vcmp.eq.s32.totalorder %v445, %v453
        %v456 = vsel %vm454, 1, 0
        %v457 = vsel %vm455, 1, 0
        %v458 = vcvt.s32.f32 %v456
        %v459 = vcvt.s32.f32 %v457
        %vm460 = vcmask 80896
        %v461 = vsel %vm460, %v423, -inf
        %462 = vmax.xlane.f32.xlu0 %v461
        %v463 = vpop.xlane.xlu0 %462
        %v464 = vsel %vm460, %v428, -inf
        %465 = vmax.xlane.f32.xlu0 %v464
        %v466 = vpop.xlane.xlu0 %465
        %v467 = vsub.f32 %v423, %v463
        %v468 = vsub.f32 %v428, %v466
        %v469 = vmul.f32 %v467, 1.442695
        %v470 = vpow.pop %v469
        %v471 = vmul.f32 %v468, 1.442695
        %v472 = vpow.pop %v471
        %v473 = vsel %vm460, %v470, 0.0
        %474 = vadd.xlane.f32.xlu0 %v473
        %v475 = vpop.xlane.xlu0 %474
        %v476 = vsel %vm460, %v472, 0.0
        %477 = vadd.xlane.f32.xlu0 %v476
        %v478 = vpop.xlane.xlu0 %477
        %v479 = vlog2.pop %v475
        %v480 = vmul.f32 %v479, 0.6931472
        %v481 = vlog2.pop %v478
        %v482 = vmul.f32 %v481, 0.6931472
        %v483 = vadd.f32 %v463, %v480
        %v484 = vadd.f32 %v466, %v482
        %v485 = vmul.f32 %v423, %v458
        %v486 = vmul.f32 %v428, %v459
        %v487 = vsel %vm460, %v485, 0.0
        %488 = vadd.xlane.f32.xlu0 %v487
        %v489 = vpop.xlane.xlu0 %488
        %v490 = vsel %vm460, %v486, 0.0
        %491 = vadd.xlane.f32.xlu0 %v490
        %v492 = vpop.xlane.xlu0 %491
        %v493 = vsub.f32 %v489, %v483
        %v494 = vsub.f32 %v492, %v484
        %v495 = vmul.f32 %v442, %v493
        %v496 = vmul.f32 %v443, %v494
        %vm497 = vcmask 7168
        %498 = vst.msk [vmem:[%s328] sm:$0xff] %vm497, %v495
        %499 = vst.msk [vmem:[%s328 + $0x8] sm:$0xff] %vm497, %v496
        %v500 = vmul.f32 %v442, %v483
        %v501 = vmul.f32 %v443, %v484
        %502 = vst.msk [vmem:[%s334] sm:$0xff] %vm497, %v500
        %503 = vst.msk [vmem:[%s334 + $0x8] sm:$0xff] %vm497, %v501
        %v504 = vmul.f32 %v442, %v423
        %v505 = vmul.f32 %v443, %v428
        %v506 = vsel %vm460, %v504, 0.0
        %v507 = vsel %vm460, %v505, 0.0
        %v508 = vadd.f32 %v506, %v507
        %v509 = vrot.slane %v508, 4
        %v510 = vadd.f32 %v508, %v509
        %v511 = vrot.slane %v510, 2
        %v512 = vadd.f32 %v510, %v511
        %v513 = vrot.slane %v512, 1
        %v514 = vadd.f32 %v512, %v513
        %vm515 = vcmask 73728
        %516 = vst.msk [vmem:[%s305] sm:$0x1] %vm515, %v514
        %v517 = vmul.f32 %v442, %v458
        %v518 = vmul.f32 %v443, %v459
        %v519 = vsel %vm460, %v517, 0.0
        %v520 = vsel %vm460, %v518, 0.0
        %v521 = vadd.f32 %v519, %v520
        %v522 = vrot.slane %v521, 4
        %v523 = vadd.f32 %v521, %v522
        %v524 = vrot.slane %v523, 2
        %v525 = vadd.f32 %v523, %v524
        %v526 = vrot.slane %v525, 1
        %v527 = vadd.f32 %v525, %v526
        %528 = vst.msk [vmem:[%s311] sm:$0x1] %vm515, %v527
        %s529 = smul.u32 2, %s25
        %p530 = scmp.lt.s32.totalorder %s529, 7
        %s531 = scalar_select %p530, %s529, 7
        %s532 = smul.addr %s531, 8
        %s533 = scalar_lea.vmem %s4, %s532
        %s534 = smul.u32 2, %s25
        %p535 = scmp.lt.s32.totalorder %s534, 7
        %s536 = scalar_select %p535, %s534, 7
        %s537 = smul.addr %s536, 8
        %s538 = scalar_lea.vmem %s5, %s537
        %s539 = sand.u32 %s179, 1
        %s540 = scalar_lea.sflag [#allocation3], %s539
        %s541 = sand.u32 %s179, 1
        %s542 = scalar_lea.vmem [#allocation2], %s541
        %s543 = sand.u32 %s205, 1
        %s544 = scalar_lea.sflag [#allocation5], %s543
        %s545 = sand.u32 %s205, 1
        %s546 = scalar_lea.vmem [#allocation4], %s545
        // Predicated region
        $region37: #{tpu_custom_call.1} parent=35 // pred_check
          %p547 = pneg %p137
        $region38: #{tpu_custom_call.1} parent=35 // pred_check_branch
          %549 = sbr.rel (%p547) target = $region40
        $region39: #{tpu_custom_call.1} parent=35 // pred_region
          %s550 = smul.u32 2, %s25
        $region40: #{tpu_custom_call.1} parent=35 // pred_fallthru
          _
        // Predicated region
        $region41: #{tpu_custom_call.1} parent=35 // pred_check
          %p551 = pneg %p163
        $region42: #{tpu_custom_call.1} parent=35 // pred_check_branch
          %553 = sbr.rel (%p551) target = $region44
        $region43: #{tpu_custom_call.1} parent=35 // pred_region
          %s554 = smul.u32 2, %s25
        $region44: #{tpu_custom_call.1} parent=35 // pred_fallthru
          _
        // Predicated region
        $region45: #{tpu_custom_call.1} parent=35 // pred_check
          %p555 = pneg %p189
        $region46: #{tpu_custom_call.1} parent=35 // pred_check_branch
          %557 = sbr.rel (%p555) target = $region48
        $region47: #{tpu_custom_call.1} parent=35 // pred_region
          %s559 = ssub.s32 16, 16
          %560 = vsyncadd %s540, %s559
          %s561 = smul.addr %s25, 16
          %s562 = scalar_lea.hbm %s6, %s561
          %s564 = sshll.u32 %s542, 4
          %s565 = int_to_ptr.vmem [resolvable:$true] %s564
          %567 = dma.vmem_to_hbm [thread:$0]  %s565, 16, %s562, %s540
        $region48: #{tpu_custom_call.1} parent=35 // pred_fallthru
          _
        // Predicated region
        $region49: #{tpu_custom_call.1} parent=35 // pred_check
          %p568 = pneg %p215
        $region50: #{tpu_custom_call.1} parent=35 // pred_check_branch
          %570 = sbr.rel (%p568) target = $region52
        $region51: #{tpu_custom_call.1} parent=35 // pred_region
          %s572 = ssub.s32 16, 16
          %573 = vsyncadd %s544, %s572
          %s574 = smul.addr %s25, 16
          %s575 = scalar_lea.hbm %s7, %s574
          %s577 = sshll.u32 %s546, 4
          %s578 = int_to_ptr.vmem [resolvable:$true] %s577
          %580 = dma.vmem_to_hbm [thread:$0]  %s578, 16, %s575, %s544
        $region52: #{tpu_custom_call.1} parent=35 // pred_fallthru
          _
      $region36: #{tpu_custom_call.1} parent=5 // pred_fallthru
        _
      %p581 = scmp.le.s32.totalorder 2, %s20
      // Predicated region
      $region53: #{tpu_custom_call.1} parent=5 // pred_check
        %p582 = pneg %p581
      $region54: #{tpu_custom_call.1} parent=5 // pred_check_branch
        %584 = sbr.rel (%p582) target = $region56
      $region55: #{tpu_custom_call.1} parent=5 // pred_region
        %s585 = ssub.s32 %s20, 2
        // Predicated region
        $region57: #{tpu_custom_call.1} parent=55 // pred_check
          %p586 = pneg %p143
        $region58: #{tpu_custom_call.1} parent=55 // pred_check_branch
          %588 = sbr.rel (%p586) target = $region60
        $region59: #{tpu_custom_call.1} parent=55 // pred_region
          %s589 = smul.u32 2, %s26
          %p590 = scmp.lt.s32.totalorder %s589, 7
          %s591 = scalar_select %p590, %s589, 7
          %s592 = smul.addr %s591, 8
          %s593 = scalar_lea.vmem %s4, %s592
        $region60: #{tpu_custom_call.1} parent=55 // pred_fallthru
          _
        // Predicated region
        $region61: #{tpu_custom_call.1} parent=55 // pred_check
          %p594 = pneg %p169
        $region62: #{tpu_custom_call.1} parent=55 // pred_check_branch
          %596 = sbr.rel (%p594) target = $region64
        $region63: #{tpu_custom_call.1} parent=55 // pred_region
          %s597 = smul.u32 2, %s26
          %p598 = scmp.lt.s32.totalorder %s597, 7
          %s599 = scalar_select %p598, %s597, 7
          %s600 = smul.addr %s599, 8
          %s601 = scalar_lea.vmem %s5, %s600
        $region64: #{tpu_custom_call.1} parent=55 // pred_fallthru
          _
        // Predicated region
        $region65: #{tpu_custom_call.1} parent=55 // pred_check
          %p602 = pneg %p195
        $region66: #{tpu_custom_call.1} parent=55 // pred_check_branch
          %604 = sbr.rel (%p602) target = $region68
        $region67: #{tpu_custom_call.1} parent=55 // pred_region
          %s605 = sand.u32 %s180, 1
          %s606 = scalar_lea.sflag [#allocation3], %s605
          %s607 = sand.u32 %s180, 1
          %s608 = scalar_lea.vmem [#allocation2], %s607
          %609 = dma.done %s606, 16
        $region68: #{tpu_custom_call.1} parent=55 // pred_fallthru
          _
        // Predicated region
        $region69: #{tpu_custom_call.1} parent=55 // pred_check
          %p610 = pneg %p221
        $region70: #{tpu_custom_call.1} parent=55 // pred_check_branch
          %612 = sbr.rel (%p610) target = $region72
        $region71: #{tpu_custom_call.1} parent=55 // pred_region
          %s613 = sand.u32 %s206, 1
          %s614 = scalar_lea.sflag [#allocation5], %s613
          %s615 = sand.u32 %s206, 1
          %s616 = scalar_lea.vmem [#allocation4], %s615
          %617 = dma.done %s614, 16
        $region72: #{tpu_custom_call.1} parent=55 // pred_fallthru
          _
      $region56: #{tpu_custom_call.1} parent=5 // pred_fallthru
        _
    $region6: #{tpu_custom_call.1} parent=1 // loop_footer
      %s24 = sadd.s32 1, %s20
    $region7: #{tpu_custom_call.1} parent=1 // loop_footer_branch
      %19 = sbr.rel target = $region3
    $region8: #{tpu_custom_call.1} parent=1 // loop_exit
      _
    %618 = vsyncpa [#allocation3], 1
    %s619 = scalar_lea.sflag [#allocation3], 1
    %620 = vsyncpa %s619, 1
    %621 = vsyncpa [#allocation5], 1
    %s622 = scalar_lea.sflag [#allocation5], 1
    %623 = vsyncpa %s622, 1

</llo_original>
